<compile_context>
chip_gen: v7x
topology: tpu7x:2x2x1
jax: 0.10.0
libtpu: 0.0.40
codegen_flags: <defaults>
</compile_context>

<pallas_src>
import jax
import jax.numpy as jnp
import numpy as np
from jax.experimental import pallas as pl
from jax.experimental.pallas import tpu as pltpu


def _toscript_kernel(x_ref, foo_ref, flag_ref):
    # self.foo = x  ->  realized entirely by input/output aliasing at the
    # pallas_call level: foo's HBM buffer *is* x's HBM buffer (donated), so
    # nothing needs to be read or written here (x_ref / foo_ref are raw HBM).
    del x_ref, foo_ref
    # Keep the lowered body non-empty at minimal cost: one scalar SMEM store
    # (scalar slot only — no vreg pressure, no VPU/VST slot use, no DMA).
    flag_ref[0] = jnp.int32(1)


def toscript_forward(x_list):
    """Pallas equivalent of ToScript.forward.

    Args:
      x_list: integer array of shape (1, N) representing the List[int] input.
        Expected to be donated by the caller (jit donate_argnums=0) so the
        alias below is a genuine zero-copy handoff.

    Returns:
      (ret, foo): ret is a traced int32 scalar (always 1); foo is the stored
      "state" — the same HBM buffer as the (donated) input, zero-copy —
      mirroring the module's side effect `self.foo = x`.
    """
    foo = pl.pallas_call(
        _toscript_kernel,
        # Derive out_shape from the input: exact shape/dtype match is required
        # for the alias to hold (no hardcoded (1, n)/int32).
        out_shape=jax.ShapeDtypeStruct(x_list.shape, x_list.dtype),
        in_specs=[pl.BlockSpec(memory_space=pl.ANY)],   # raw HBM, no DMA
        out_specs=pl.BlockSpec(memory_space=pl.ANY),    # raw HBM, no DMA
        scratch_shapes=[pltpu.SMEM((1,), jnp.int32)],
        input_output_aliases={0: 0},                    # foo aliases x
    )(x_list)
    # return 1  ->  plain constant; no SMEM output, no host sync here.
    ret = jnp.int32(1)
    return ret, foo


if __name__ == "__main__":
    key = jax.random.PRNGKey(0)
    # Small List[int] input, e.g. 8 integers.
    x = jax.random.randint(key, (1, 8), minval=0, maxval=100, dtype=jnp.int32)

    # Snapshot the input on the HOST before the donating call — x's device
    # buffer is invalid after donation, so we must not re-read it.
    x_host = np.asarray(jax.device_get(x))

    # Donate x so input_output_aliases={0:0} is a true zero-copy handoff
    # (no defensive HBM->HBM copy inserted by XLA).
    fwd = jax.jit(toscript_forward, donate_argnums=0)
    ret, foo = fwd(x)
    jax.block_until_ready((ret, foo))

    # Semantics check: return value is exactly 1, state holds the input list.
    assert int(ret) == 1
    assert np.array_equal(np.asarray(jax.device_get(foo)), x_host)
    print("KERNEL_OK")
</pallas_src>

<mosaic_0001>
module attributes {stable_mosaic.version = 11 : i64} {
  func.func @_toscript_kernel(%arg0: memref<1x8xi32, #tpu.memory_space<any>>, %arg1: memref<1x8xi32, #tpu.memory_space<any>>, %arg2: memref<1xi32, #tpu.memory_space<smem>>) attributes {dimension_semantics = [], scalar_prefetch = 0 : i64, scratch_operands = 1 : i64, tpu.core_type = #tpu.core_type<tc>} {
    %c1_i32 = arith.constant 1 : i32
    %c0 = arith.constant 0 : index
    %0 = memref.load %arg2[%c0] : memref<1xi32, #tpu.memory_space<smem>>
    memref.store %c1_i32, %arg2[%c0] : memref<1xi32, #tpu.memory_space<smem>>
    return
  }
}

</mosaic_0001>

<llo_original>
// kernel: toscript_forward.1
$region0: #{toscript_forward.1}
  #allocation0 [shape = 'u32[]', space=smem, size = 0x4, offset = 0x4, fixed_abs, tag = 'smem constant byte address 0x4 - core index']
  #allocation1 [shape = 'u32[144,128]{1,0:T(1,128)}', space=vmem, size = 0x12000, scoped, tag = 'internal scratch']
  #allocation2 [shape = 's32[1]{0:T(128)}', space=smem, size = 0x200, scoped, tag = 'scratch operand']
  %s0 = inlined_call_operand.hbm [shape: s32[1,8], index: 0, kind: input, shape index: {}, may-alias: {0,1}]
  %s1 = inlined_call_operand.hbm [shape: s32[1,8], index: 1, kind: output, shape index: {}, may-alias: {0,1}]
  %s2 = sld [smem:[#allocation0]]
  $region2: #{toscript_forward.1} parent=0
    _
  %s4 = ssub.s32 1, %s2
  %s5 = scalar_select 0, %s4, %s2
  %s6 = scalar_lea.smem [#allocation2], 0
  %7 = sst [smem:[%s6]] 1

</llo_original>
